<compile_context>
chip_gen: v5e
topology: v5e:2x2
jax: 0.10.0
libtpu: 0.0.40
codegen_flags: <defaults>
</compile_context>

<pallas_src>
import functools

import numpy as np
import jax
import jax.numpy as jnp
from jax.experimental import pallas as pl
from jax.experimental.pallas import tpu as pltpu

F32 = jnp.float32
BF16 = jnp.bfloat16
NEG = -1e30
LANE = 128
SUB = 8


def _round_up(v, m):
    return ((v + m - 1) // m) * m


def _cp(dims):
    # explicit scoped-VMEM budget (works on v5e/v6e/v7x); tiles below are tiny
    return pltpu.CompilerParams(
        dimension_semantics=dims,
        vmem_limit_bytes=32 * 1024 * 1024,
    )


# ------------------------------- kernels -------------------------------

def _linear_deg_kernel(x_ref, w_ref, d_ref, o_ref):
    # y = (x @ W) * deg^-1/2     x:[tn,Din]  w:[Din,Dout]  d:[tn,1]
    xw = jnp.dot(x_ref[...].astype(BF16), w_ref[...].astype(BF16),
                 preferred_element_type=jnp.float32)
    o_ref[...] = xw * d_ref[...]


def _gcn_maxagg_kernel(a_ref, y_ref, d_ref, b_ref, o_ref, acc_ref):
    # running max over neighbor (j) blocks; out_i = relu(d_i * max_j y_j + bias)
    j = pl.program_id(1)

    @pl.when(j == 0)
    def _():
        acc_ref[...] = jnp.full(acc_ref.shape, NEG, jnp.float32)

    a = a_ref[...]                                        # [ti, tj] 0/1 (self loops incl.)
    y = y_ref[...]                                        # [tj, D]  (W x_j) * d_j^-1/2
    cand = jnp.where(a[:, :, None] > 0.0, y[None, :, :], NEG)   # [ti, tj, D]
    acc_ref[...] = jnp.maximum(acc_ref[...], jnp.max(cand, axis=1))

    @pl.when(j == pl.num_programs(1) - 1)
    def _():
        # -1e30 sentinel is safe: every real row has a self loop, padded rows have d=0
        o_ref[...] = jnp.maximum(d_ref[...] * acc_ref[...] + b_ref[...], 0.0)


def _attn_body(h_ref, val_ref, am_ref, g_ref, wcat_ref, bcat_ref,
               wgo_ref, wgg_ref, bg_ref, hp):
    h = h_ref[0] * val_ref[0]                             # zero invalid/padded rows [Nm,F]
    # fused att|feat projection, bf16 MXU, f32 accumulation
    proj = jnp.dot(h.astype(BF16), wcat_ref[...].astype(BF16),
                   preferred_element_type=jnp.float32) + bcat_ref[...]
    logits = proj[:, :hp]                                 # padded cols carry -1e30 bias
    feat = proj[:, hp:]
    mx = jnp.max(logits, axis=-1, keepdims=True)
    e = jnp.exp(logits - mx)
    att = e * pl.reciprocal(jnp.sum(e, axis=-1, keepdims=True), approx=True)
    att = att * am_ref[0]
    pooled = jnp.sum(att * feat, axis=0, keepdims=True)   # per-graph sum over Nmax  [1,hp]
    g = g_ref[0]                                          # [1, gp]
    g_delta = (jnp.dot(pooled, wgo_ref[...], preferred_element_type=jnp.float32)
               + jnp.dot(g, wgg_ref[...], preferred_element_type=jnp.float32)
               + bg_ref[...])                             # glb(cat([out, g]))
    return g + g_delta


def _attn_kernel(h_ref, val_ref, am_ref, g_ref, wcat_ref, bcat_ref,
                 wgo_ref, wgg_ref, bg_ref, o_ref, *, hp):
    o_ref[0] = _attn_body(h_ref, val_ref, am_ref, g_ref, wcat_ref, bcat_ref,
                          wgo_ref, wgg_ref, bg_ref, hp)


def _attn_out_kernel(h_ref, val_ref, am_ref, g_ref, wcat_ref, bcat_ref,
                     wgo_ref, wgg_ref, bg_ref, w1_ref, b1_ref, w2_ref, b2_ref,
                     o_ref, *, hp):
    # final attention fused with the output MLP (Linear -> ReLU -> Linear)
    gn = _attn_body(h_ref, val_ref, am_ref, g_ref, wcat_ref, bcat_ref,
                    wgo_ref, wgg_ref, bg_ref, hp)
    hid = jnp.maximum(jnp.dot(gn, w1_ref[...], preferred_element_type=jnp.float32)
                      + b1_ref[...], 0.0)
    o_ref[0] = jnp.dot(hid, w2_ref[...], preferred_element_type=jnp.float32) + b2_ref[...]


# --------------------------- pallas_call wrappers ---------------------------

def linear_deg(x, w, dinv, tn=LANE):
    npad, din = x.shape
    dout = w.shape[1]
    return pl.pallas_call(
        _linear_deg_kernel,
        out_shape=jax.ShapeDtypeStruct((npad, dout), F32),
        grid_spec=pltpu.PrefetchScalarGridSpec(
            num_scalar_prefetch=0,
            grid=(npad // tn,),
            in_specs=[pl.BlockSpec((tn, din), lambda i: (i, 0)),
                      pl.BlockSpec((din, dout), lambda i: (0, 0)),
                      pl.BlockSpec((tn, 1), lambda i: (i, 0))],
            out_specs=pl.BlockSpec((tn, dout), lambda i: (i, 0))),
        compiler_params=_cp(("parallel",)),
    )(x, w, dinv)


def gcn_maxagg(adj, y, dinv, bias, ti=SUB, tj=LANE):
    npad = adj.shape[0]
    dout = y.shape[1]
    return pl.pallas_call(
        _gcn_maxagg_kernel,
        out_shape=jax.ShapeDtypeStruct((npad, dout), F32),
        grid_spec=pltpu.PrefetchScalarGridSpec(
            num_scalar_prefetch=0,
            grid=(npad // ti, npad // tj),          # j (reduction) last
            in_specs=[pl.BlockSpec((ti, tj), lambda i, j: (i, j)),
                      pl.BlockSpec((tj, dout), lambda i, j: (j, 0)),
                      pl.BlockSpec((ti, 1), lambda i, j: (i, 0)),
                      pl.BlockSpec((1, dout), lambda i, j: (0, 0))],
            out_specs=pl.BlockSpec((ti, dout), lambda i, j: (i, 0)),
            scratch_shapes=[pltpu.VMEM((ti, dout), jnp.float32)]),
        compiler_params=_cp(("parallel", "arbitrary")),
    )(adj, y, dinv, bias)


def _full_spec(arr):
    return pl.BlockSpec(arr.shape, lambda b: tuple(0 for _ in arr.shape))


def attention(h, valid, amask, g, ap):
    bsz, nm, fp = h.shape
    gp = g.shape[-1]
    hp = ap['hp']
    out = pl.pallas_call(
        functools.partial(_attn_kernel, hp=hp),
        out_shape=jax.ShapeDtypeStruct((bsz, 1, gp), F32),
        grid_spec=pltpu.PrefetchScalarGridSpec(
            num_scalar_prefetch=0,
            grid=(bsz,),
            in_specs=[pl.BlockSpec((1, nm, fp), lambda b: (b, 0, 0)),
                      pl.BlockSpec((1, nm, 1), lambda b: (b, 0, 0)),
                      pl.BlockSpec((1, nm, 1), lambda b: (b, 0, 0)),
                      pl.BlockSpec((1, 1, gp), lambda b: (b, 0, 0)),
                      _full_spec(ap['wcat']), _full_spec(ap['bcat']),
                      _full_spec(ap['wgo']), _full_spec(ap['wgg']),
                      _full_spec(ap['bg'])],
            out_specs=pl.BlockSpec((1, 1, gp), lambda b: (b, 0, 0))),
        compiler_params=_cp(("parallel",)),
    )(h, valid, amask, g.reshape(bsz, 1, gp),
      ap['wcat'], ap['bcat'], ap['wgo'], ap['wgg'], ap['bg'])
    return out.reshape(bsz, gp)


def attention_out(h, valid, amask, g, ap, w1, b1, w2, b2):
    bsz, nm, fp = h.shape
    gp = g.shape[-1]
    hp = ap['hp']
    dout = w2.shape[1]
    out = pl.pallas_call(
        functools.partial(_attn_out_kernel, hp=hp),
        out_shape=jax.ShapeDtypeStruct((bsz, 1, dout), F32),
        grid_spec=pltpu.PrefetchScalarGridSpec(
            num_scalar_prefetch=0,
            grid=(bsz,),
            in_specs=[pl.BlockSpec((1, nm, fp), lambda b: (b, 0, 0)),
                      pl.BlockSpec((1, nm, 1), lambda b: (b, 0, 0)),
                      pl.BlockSpec((1, nm, 1), lambda b: (b, 0, 0)),
                      pl.BlockSpec((1, 1, gp), lambda b: (b, 0, 0)),
                      _full_spec(ap['wcat']), _full_spec(ap['bcat']),
                      _full_spec(ap['wgo']), _full_spec(ap['wgg']),
                      _full_spec(ap['bg']),
                      _full_spec(w1), _full_spec(b1),
                      _full_spec(w2), _full_spec(b2)],
            out_specs=pl.BlockSpec((1, 1, dout), lambda b: (b, 0, 0))),
        compiler_params=_cp(("parallel",)),
    )(h, valid, amask, g.reshape(bsz, 1, gp),
      ap['wcat'], ap['bcat'], ap['wgo'], ap['wgg'], ap['bg'], w1, b1, w2, b2)
    return out.reshape(bsz, dout)


# ------------------------------ host-side glue ------------------------------

def dense_gcn_norm_padded(ei, num_nodes, npad):
    # dense gcn_norm (add self loops), factored:  norm(i,j) = dinv[i]*A[i,j]*dinv[j]
    A = np.zeros((npad, npad), np.float32)
    src, dst = np.asarray(ei[0]), np.asarray(ei[1])
    A[dst, src] = 1.0
    idx = np.arange(num_nodes)
    A[idx, idx] = 1.0                               # self loops for real nodes only
    deg = A.sum(axis=1)
    dinv = np.where(deg > 0, deg ** -0.5, 0.0).astype(np.float32)
    return jnp.asarray(A), jnp.asarray(dinv[:, None])


def _pad2(a, rows, cols, fill=0.0):
    a = np.asarray(a, np.float32)
    out = np.full((rows, cols), fill, np.float32)
    out[:a.shape[0], :a.shape[1]] = a
    return jnp.asarray(out)


def linear_params(key, din, dout):
    scale = 1.0 / np.sqrt(din)
    kw, kb = jax.random.split(key)
    w = np.asarray(jax.random.uniform(kw, (din, dout), F32, -scale, scale))
    b = np.asarray(jax.random.uniform(kb, (1, dout), F32, -scale, scale))
    return w, b


def init_params(key, in_dim, hidden1, hidden2):
    gdim = hidden1
    ip, h1p, h2p, gp = (_round_up(d, LANE) for d in (in_dim, hidden1, hidden2, gdim))
    keys = jax.random.split(key, 7)
    p = {'dims': dict(ip=ip, h1p=h1p, h2p=h2p, gp=gp)}

    w, b = linear_params(keys[0], in_dim, hidden1)
    p['conv1_w'], p['conv1_b'] = _pad2(w, ip, h1p), _pad2(b, 1, h1p)
    w, b = linear_params(keys[1], hidden1, hidden2)
    p['conv2_w'], p['conv2_b'] = _pad2(w, h1p, h2p), _pad2(b, 1, h2p)

    def attn_params(k, d_in, h_dim, g_dim, dp, hpad, gpad):
        ka, kf, kg = jax.random.split(k, 3)
        wa, ba = linear_params(ka, d_in, h_dim)
        wf, bf = linear_params(kf, d_in, h_dim)
        wg, bg = linear_params(kg, h_dim + g_dim, g_dim)
        # fuse att/feat projections; padded att-bias entries = -1e30 so the padded
        # softmax columns contribute exp(.) == 0.
        wcat = jnp.concatenate([_pad2(wa, dp, hpad), _pad2(wf, dp, hpad)], axis=1)
        bcat = jnp.concatenate([_pad2(ba, 1, hpad, fill=NEG), _pad2(bf, 1, hpad)], axis=1)
        return dict(wcat=wcat, bcat=bcat, hp=hpad,
                    wgo=_pad2(wg[:h_dim], hpad, gpad),
                    wgg=_pad2(wg[h_dim:], gpad, gpad),
                    bg=_pad2(bg, 1, gpad))

    p['g0'] = attn_params(keys[2], in_dim, hidden1, gdim, ip, h1p, gp)
    p['g1'] = attn_params(keys[3], hidden1, hidden1, gdim, h1p, h1p, gp)
    p['g2'] = attn_params(keys[4], hidden2, hidden2, gdim, h2p, h2p, gp)

    w, b = linear_params(keys[5], gdim, hidden2)
    p['out1_w'], p['out1_b'] = _pad2(w, gp, h2p), _pad2(b, 1, h2p)
    w, b = linear_params(keys[6], hidden2, 1)
    p['out2_w'], p['out2_b'] = _pad2(w, h2p, LANE), _pad2(b, 1, LANE)   # lane-dense out
    return p


def forward(x, ei, params, batches=None):
    x_np = np.asarray(x, np.float32)
    n, in_dim = x_np.shape
    dims = params['dims']
    ip, gp = dims['ip'], dims['gp']

    # One-time host bookkeeping for data-dependent shapes (same semantics as the
    # reference's pad_and_pack); reused by every layer -> no per-layer host sync.
    # TODO(synk): training/Adam step and the exact float host test (x[:,0]==1) mirror
    # the reference and are kept as host-side glue, not Pallas.
    hosts = np.where(x_np[:, 0] == 1.0)[0]
    if batches is None:
        batches = np.array([0, len(hosts)], dtype=np.int64)
    else:
        batches = np.asarray(batches, dtype=np.int64)
    nb = len(batches) - 1
    max_batch = int((batches[1:] - batches[:-1]).max())
    nmaxp = max(SUB, _round_up(max_batch, SUB))

    host_idx = np.zeros((nb, nmaxp), np.int32)
    valid = np.zeros((nb, nmaxp, 1), np.float32)     # 1 for real host rows
    amask2 = np.zeros((nb, nmaxp, 1), np.float32)    # reference g2 mask: ones over max_batch
    for b in range(nb):
        st, en = int(batches[b]), int(batches[b + 1])
        cnt = en - st
        host_idx[b, :cnt] = hosts[st:en]
        valid[b, :cnt] = 1.0
        amask2[b, :max_batch] = 1.0
    host_idx = jnp.asarray(host_idx.reshape(-1))
    valid = jnp.asarray(valid)
    amask2 = jnp.asarray(amask2)

    npad = max(LANE, _round_up(n, LANE))
    x_pad = np.zeros((npad, ip), np.float32)
    x_pad[:n, :in_dim] = x_np
    x_pad = jnp.asarray(x_pad)

    adj, dinv = dense_gcn_norm_padded(ei, n, npad)

    def gather(feat):
        # device-side gather of host rows -> [B, Nmax_pad, F] (no host round trip)
        return jnp.take(feat, host_idx, axis=0).reshape(nb, nmaxp, feat.shape[1])

    # g0 attention on raw host features, g starts at zeros
    g = jnp.zeros((nb, gp), F32)
    g = attention(gather(x_pad), valid, valid, g, params['g0'])

    # conv1 (GCN max aggregation) + relu
    y1 = linear_deg(x_pad, params['conv1_w'], dinv)
    x1 = gcn_maxagg(adj, y1, dinv, params['conv1_b'])
    g = attention(gather(x1), valid, valid, g, params['g1'])

    # conv2 + relu, then g2 attention (reference uses no mask -> ones over max_batch)
    y2 = linear_deg(x1, params['conv2_w'], dinv)
    x2 = gcn_maxagg(adj, y2, dinv, params['conv2_b'])
    out = attention_out(gather(x2), valid, amask2, g, params['g2'],
                        params['out1_w'], params['out1_b'],
                        params['out2_w'], params['out2_b'])
    return out[:, :1]


if __name__ == "__main__":
    key = jax.random.PRNGKey(0)
    k_x, k_p = jax.random.split(key)
    N, IN_DIM, H1, H2 = 16, 8, 32, 16   # small hidden1/hidden2 for the synthetic run

    x_np = np.array(jax.random.normal(k_x, (N, IN_DIM), F32))
    x_np[:, 0] = 0.0
    x_np[:6, 0] = 1.0                   # nodes 0..5 are hosts (x[:,0] == 1)
    x = jnp.asarray(x_np)

    # deterministic edge list: bidirectional ring + a few chords  ([2, E])
    src, dst = [], []
    for i in range(N):
        src += [i, (i + 1) % N]
        dst += [(i + 1) % N, i]
    for i in range(0, N, 4):
        src.append(i)
        dst.append((i + 7) % N)
    ei = np.stack([np.array(src), np.array(dst)]).astype(np.int32)

    batches = np.array([0, 4, 6], dtype=np.int64)   # two graphs: 4 hosts, 2 hosts

    params = init_params(k_p, IN_DIM, H1, H2)
    out = forward(x, ei, params, batches=batches)
    out = jax.block_until_ready(out)
    assert out.shape == (2, 1) and out.dtype == jnp.float32
    print("KERNEL_OK")
</pallas_src>

<mosaic_0001>
module attributes {stable_mosaic.version = 11 : i64} {
  func.func @_attn_kernel(%arg0: i32, %arg1: memref<1x8x128xf32, #tpu.memory_space<vmem>>, %arg2: memref<1x8x1xf32, #tpu.memory_space<vmem>>, %arg3: memref<1x8x1xf32, #tpu.memory_space<vmem>>, %arg4: memref<1x1x128xf32, #tpu.memory_space<vmem>>, %arg5: memref<128x256xf32, #tpu.memory_space<vmem>>, %arg6: memref<1x256xf32, #tpu.memory_space<vmem>>, %arg7: memref<128x128xf32, #tpu.memory_space<vmem>>, %arg8: memref<128x128xf32, #tpu.memory_space<vmem>>, %arg9: memref<1x128xf32, #tpu.memory_space<vmem>>, %arg10: memref<1x1x128xf32, #tpu.memory_space<vmem>>) attributes {dimension_semantics = [#tpu.dimension_semantics<parallel>], iteration_bounds = array<i64: 2>, scalar_prefetch = 0 : i64, scratch_operands = 0 : i64, tpu.core_type = #tpu.core_type<tc>, window_params = [{transform_indices = @transform_0, window_bounds = array<i64: 1, 8, 128>}, {transform_indices = @transform_1, window_bounds = array<i64: 1, 8, 1>}, {transform_indices = @transform_2, window_bounds = array<i64: 1, 8, 1>}, {transform_indices = @transform_3, window_bounds = array<i64: 1, 1, 128>}, {pipeline_mode = #tpu.pipeline_mode<synchronous>, transform_indices = @transform_4, window_bounds = array<i64: 128, 256>}, {pipeline_mode = #tpu.pipeline_mode<synchronous>, transform_indices = @transform_5, window_bounds = array<i64: 1, 256>}, {pipeline_mode = #tpu.pipeline_mode<synchronous>, transform_indices = @transform_6, window_bounds = array<i64: 128, 128>}, {pipeline_mode = #tpu.pipeline_mode<synchronous>, transform_indices = @transform_7, window_bounds = array<i64: 128, 128>}, {pipeline_mode = #tpu.pipeline_mode<synchronous>, transform_indices = @transform_8, window_bounds = array<i64: 1, 128>}, {transform_indices = @transform_9, window_bounds = array<i64: 1, 1, 128>}]} {
    %c0 = arith.constant 0 : index
    %c0_0 = arith.constant 0 : index
    %c0_1 = arith.constant 0 : index
    %0 = vector.load %arg1[%c0, %c0_0, %c0_1] : memref<1x8x128xf32, #tpu.memory_space<vmem>>, vector<1x8x128xf32>
    %1 = vector.shape_cast %0 : vector<1x8x128xf32> to vector<8x128xf32>
    %c0_2 = arith.constant 0 : index
    %c0_3 = arith.constant 0 : index
    %c0_4 = arith.constant 0 : index
    %2 = vector.load %arg2[%c0_2, %c0_3, %c0_4] : memref<1x8x1xf32, #tpu.memory_space<vmem>>, vector<1x8x1xf32>
    %3 = vector.shape_cast %2 : vector<1x8x1xf32> to vector<8x1xf32>
    %4 = vector.broadcast %3 : vector<8x1xf32> to vector<8x128xf32>
    %5 = arith.mulf %1, %4 : vector<8x128xf32>
    %6 = arith.truncf %5 : vector<8x128xf32> to vector<8x128xbf16>
    %c0_5 = arith.constant 0 : index
    %c0_6 = arith.constant 0 : index
    %7 = vector.load %arg5[%c0_5, %c0_6] : memref<128x256xf32, #tpu.memory_space<vmem>>, vector<128x256xf32>
    %8 = arith.truncf %7 : vector<128x256xf32> to vector<128x256xbf16>
    %cst = arith.constant dense<0.000000e+00> : vector<8x256xf32>
    %9 = tpu.matmul %6, %8, %cst {dimension_numbers = #tpu.dot_dimension_numbers<[1], [0], [0], [1], [0, 0, 1, 1], [], []>} : vector<8x128xbf16>, vector<128x256xbf16>, vector<8x256xf32> -> vector<8x256xf32>
    %c0_7 = arith.constant 0 : index
    %c0_8 = arith.constant 0 : index
    %10 = vector.load %arg6[%c0_7, %c0_8] : memref<1x256xf32, #tpu.memory_space<vmem>>, vector<1x256xf32>
    %11 = vector.broadcast %10 : vector<1x256xf32> to vector<8x256xf32>
    %12 = arith.addf %9, %11 : vector<8x256xf32>
    %13 = vector.extract_strided_slice %12 {offsets = [0, 0], sizes = [8, 128], strides = [1, 1]} : vector<8x256xf32> to vector<8x128xf32>
    %14 = vector.extract_strided_slice %12 {offsets = [0, 128], sizes = [8, 128], strides = [1, 1]} : vector<8x256xf32> to vector<8x128xf32>
    %cst_9 = arith.constant dense<0xFF800000> : vector<8xf32>
    %15 = vector.multi_reduction <maximumf>, %13, %cst_9 [1] : vector<8x128xf32> to vector<8xf32>
    %16 = vector.shape_cast %15 : vector<8xf32> to vector<8x1xf32>
    %17 = vector.broadcast %16 : vector<8x1xf32> to vector<8x128xf32>
    %18 = arith.subf %13, %17 : vector<8x128xf32>
    %19 = math.exp %18 : vector<8x128xf32>
    %cst_10 = arith.constant dense<0.000000e+00> : vector<8xf32>
    %20 = vector.multi_reduction <add>, %19, %cst_10 [1] : vector<8x128xf32> to vector<8xf32>
    %21 = vector.shape_cast %20 : vector<8xf32> to vector<8x1xf32>
    %22 = tpu.reciprocal %21 {approx = true} : vector<8x1xf32> -> vector<8x1xf32>
    %23 = vector.broadcast %22 : vector<8x1xf32> to vector<8x128xf32>
    %24 = arith.mulf %19, %23 : vector<8x128xf32>
    %c0_11 = arith.constant 0 : index
    %c0_12 = arith.constant 0 : index
    %c0_13 = arith.constant 0 : index
    %25 = vector.load %arg3[%c0_11, %c0_12, %c0_13] : memref<1x8x1xf32, #tpu.memory_space<vmem>>, vector<1x8x1xf32>
    %26 = vector.shape_cast %25 : vector<1x8x1xf32> to vector<8x1xf32>
    %27 = vector.broadcast %26 : vector<8x1xf32> to vector<8x128xf32>
    %28 = arith.mulf %24, %27 : vector<8x128xf32>
    %29 = arith.mulf %28, %14 : vector<8x128xf32>
    %cst_14 = arith.constant dense<0.000000e+00> : vector<128xf32>
    %30 = vector.multi_reduction <add>, %29, %cst_14 [0] : vector<8x128xf32> to vector<128xf32>
    %31 = vector.shape_cast %30 : vector<128xf32> to vector<1x128xf32>
    %c0_15 = arith.constant 0 : index
    %c0_16 = arith.constant 0 : index
    %c0_17 = arith.constant 0 : index
    %32 = vector.load %arg4[%c0_15, %c0_16, %c0_17] : memref<1x1x128xf32, #tpu.memory_space<vmem>>, vector<1x1x128xf32>
    %33 = vector.shape_cast %32 : vector<1x1x128xf32> to vector<1x128xf32>
    %c0_18 = arith.constant 0 : index
    %c0_19 = arith.constant 0 : index
    %34 = vector.load %arg7[%c0_18, %c0_19] : memref<128x128xf32, #tpu.memory_space<vmem>>, vector<128x128xf32>
    %cst_20 = arith.constant dense<0.000000e+00> : vector<1x128xf32>
    %35 = tpu.matmul %31, %34, %cst_20 {dimension_numbers = #tpu.dot_dimension_numbers<[1], [0], [0], [1], [0, 0, 1, 1], [], []>} : vector<1x128xf32>, vector<128x128xf32>, vector<1x128xf32> -> vector<1x128xf32>
    %c0_21 = arith.constant 0 : index
    %c0_22 = arith.constant 0 : index
    %36 = vector.load %arg8[%c0_21, %c0_22] : memref<128x128xf32, #tpu.memory_space<vmem>>, vector<128x128xf32>
    %cst_23 = arith.constant dense<0.000000e+00> : vector<1x128xf32>
    %37 = tpu.matmul %33, %36, %cst_23 {dimension_numbers = #tpu.dot_dimension_numbers<[1], [0], [0], [1], [0, 0, 1, 1], [], []>} : vector<1x128xf32>, vector<128x128xf32>, vector<1x128xf32> -> vector<1x128xf32>
    %38 = arith.addf %35, %37 : vector<1x128xf32>
    %c0_24 = arith.constant 0 : index
    %c0_25 = arith.constant 0 : index
    %39 = vector.load %arg9[%c0_24, %c0_25] : memref<1x128xf32, #tpu.memory_space<vmem>>, vector<1x128xf32>
    %40 = arith.addf %38, %39 : vector<1x128xf32>
    %41 = arith.addf %33, %40 : vector<1x128xf32>
    %c0_26 = arith.constant 0 : index
    %c0_27 = arith.constant 0 : index
    %c0_28 = arith.constant 0 : index
    %42 = vector.load %arg10[%c0_26, %c0_27, %c0_28] : memref<1x1x128xf32, #tpu.memory_space<vmem>>, vector<1x1x128xf32>
    %43 = vector.shape_cast %42 : vector<1x1x128xf32> to vector<1x128xf32>
    %44 = vector.shape_cast %41 : vector<1x128xf32> to vector<1x1x128xf32>
    tpu.vector_store %arg10[%c0_26, %c0_27, %c0_28], %44 {strides = array<i32>} : memref<1x1x128xf32, #tpu.memory_space<vmem>>, vector<1x1x128xf32>,
    return
  }
  func.func @transform_0(%arg0: i32) -> (i32, i32, i32) {
    %c0_i32 = arith.constant 0 : i32
    %c0_i32_0 = arith.constant 0 : i32
    %c0_i32_1 = arith.constant 0 : i32
    return %arg0, %c0_i32, %c0_i32_0 : i32, i32, i32
  }
  func.func @transform_1(%arg0: i32) -> (i32, i32, i32) {
    %c0_i32 = arith.constant 0 : i32
    %c0_i32_0 = arith.constant 0 : i32
    %c0_i32_1 = arith.constant 0 : i32
    return %arg0, %c0_i32, %c0_i32_0 : i32, i32, i32
  }
  func.func @transform_2(%arg0: i32) -> (i32, i32, i32) {
    %c0_i32 = arith.constant 0 : i32
    %c0_i32_0 = arith.constant 0 : i32
    %c0_i32_1 = arith.constant 0 : i32
    return %arg0, %c0_i32, %c0_i32_0 : i32, i32, i32
  }
  func.func @transform_3(%arg0: i32) -> (i32, i32, i32) {
    %c0_i32 = arith.constant 0 : i32
    %c0_i32_0 = arith.constant 0 : i32
    %c0_i32_1 = arith.constant 0 : i32
    return %arg0, %c0_i32, %c0_i32_0 : i32, i32, i32
  }
  func.func @transform_4(%arg0: i32) -> (i32, i32) {
    %c0_i32 = arith.constant 0 : i32
    %c0_i32_0 = arith.constant 0 : i32
    %c0_i32_1 = arith.constant 0 : i32
    return %c0_i32, %c0_i32_0 : i32, i32
  }
  func.func @transform_5(%arg0: i32) -> (i32, i32) {
    %c0_i32 = arith.constant 0 : i32
    %c0_i32_0 = arith.constant 0 : i32
    %c0_i32_1 = arith.constant 0 : i32
    return %c0_i32, %c0_i32_0 : i32, i32
  }
  func.func @transform_6(%arg0: i32) -> (i32, i32) {
    %c0_i32 = arith.constant 0 : i32
    %c0_i32_0 = arith.constant 0 : i32
    %c0_i32_1 = arith.constant 0 : i32
    return %c0_i32, %c0_i32_0 : i32, i32
  }
  func.func @transform_7(%arg0: i32) -> (i32, i32) {
    %c0_i32 = arith.constant 0 : i32
    %c0_i32_0 = arith.constant 0 : i32
    %c0_i32_1 = arith.constant 0 : i32
    return %c0_i32, %c0_i32_0 : i32, i32
  }
  func.func @transform_8(%arg0: i32) -> (i32, i32) {
    %c0_i32 = arith.constant 0 : i32
    %c0_i32_0 = arith.constant 0 : i32
    %c0_i32_1 = arith.constant 0 : i32
    return %c0_i32, %c0_i32_0 : i32, i32
  }
  func.func @transform_9(%arg0: i32) -> (i32, i32, i32) {
    %c0_i32 = arith.constant 0 : i32
    %c0_i32_0 = arith.constant 0 : i32
    %c0_i32_1 = arith.constant 0 : i32
    return %arg0, %c0_i32, %c0_i32_0 : i32, i32, i32
  }
}

</mosaic_0001>

<llo_original>
// kernel: tpu_custom_call.1
$region0: #{tpu_custom_call.1}
  #allocation0 [shape = 'u32[]', space=smem, size = 0x4, offset = 0x4, fixed_abs, tag = 'smem constant byte address 0x4 - core index']
  #allocation1 [shape = 'u32[72,128]{1,0:T(1,128)}', space=vmem, size = 0x9000, scoped, tag = 'internal scratch']
  %s0 = inlined_call_operand.vmem [shape: f32[2,8,128], index: 0, kind: input, shape index: {}]
  %s1 = inlined_call_operand.vmem [shape: f32[2,8,1], index: 1, kind: input, shape index: {}]
  %s2 = inlined_call_operand.vmem [shape: f32[2,8,1], index: 2, kind: input, shape index: {}]
  %s3 = inlined_call_operand.vmem [shape: f32[2,1,128], index: 3, kind: input, shape index: {}]
  %s4 = inlined_call_operand.hbm [shape: f32[128,256], index: 4, kind: input, shape index: {}]
  %s5 = inlined_call_operand.vmem [shape: f32[1,256], index: 5, kind: input, shape index: {}]
  %s6 = inlined_call_operand.hbm [shape: f32[128,128], index: 6, kind: input, shape index: {}]
  %s7 = inlined_call_operand.hbm [shape: f32[128,128], index: 7, kind: input, shape index: {}]
  %s8 = inlined_call_operand.vmem [shape: f32[1,128], index: 8, kind: input, shape index: {}]
  %s9 = inlined_call_operand.hbm [shape: f32[2,1,128], index: 9, kind: output, shape index: {}]
  %s10 = sld [smem:[#allocation0]]
  $region81: #{tpu_custom_call.1} parent=0
    _
  %s12 = ssub.s32 1, %s10
  %s13 = scalar_select 0, %s12, %s10
  $region1: #{tpu_custom_call.1} parent=0
    #allocation2 [shape = 'u8[131072]{0}', space=vmem, size = 0x20000, scoped, tag = 'input window, operand 4, single buffered']
    #allocation3 [shape = 's32[2]{0}', space=sflag, size = 0x8, scoped, tag = 'scoped memory for tpu_custom_call.1']
    #allocation4 [shape = 's32[2]{0}', space=sflag, size = 0x8, scoped, tag = 'scoped memory for tpu_custom_call.1']
    #allocation5 [shape = 'u8[65536]{0}', space=vmem, size = 0x10000, scoped, tag = 'input window, operand 6, single buffered']
    #allocation6 [shape = 's32[1]{0}', space=sflag, size = 0x4, scoped, tag = 'scoped memory for tpu_custom_call.1']
    #allocation7 [shape = 'u8[65536]{0}', space=vmem, size = 0x10000, scoped, tag = 'input window, operand 7, single buffered']
    #allocation8 [shape = 'u8[1024]{0}', space=vmem, size = 0x400, scoped, tag = 'output window, operand 0']
    %14 = vsyncpa [#allocation3], 0
    %15 = vsyncpa [#allocation6], 0
    %16 = vsyncpa [#allocation4], 0
    %s17 = scalar_lea.sflag [#allocation4], 1
    %18 = vsyncpa %s17, 0
    loop: start=0, step=1, limit=4
    $region2: #{tpu_custom_call.1} parent=1 // loop_pre_header
      _
    $region3: #{tpu_custom_call.1} parent=1 // loop_header
      %s20 = sphi 0, %s24
      %p21 = scmp.ge.s32.totalorder %s20, 4
      %s30 = sphi 0, %s32
      %s33 = sphi 0, %s30
      %s34 = sphi 0, %s33
      %s50 = sphi 0, %s34
      %s56 = sphi 0, %s58
      %s59 = sphi 0, %s56
      %s60 = sphi 0, %s59
      %s76 = sphi 0, %s60
      %s82 = sphi 0, %s84
      %s85 = sphi 0, %s82
      %s86 = sphi 0, %s85
      %s102 = sphi 0, %s86
      %s108 = sphi 0, %s110
      %s111 = sphi 0, %s108
      %s112 = sphi 0, %s111
      %s128 = sphi 0, %s112
      %s132 = sphi 0, %s132
      %s134 = sphi 0, %s132
      %s135 = sphi 0, %s134
      %s149 = sphi 0, %s135
      %s153 = sphi 0, %s153
      %s155 = sphi 0, %s153
      %s156 = sphi 0, %s155
      %s170 = sphi 0, %s156
      %s174 = sphi 0, %s174
      %s176 = sphi 0, %s174
      %s177 = sphi 0, %s176
      %s191 = sphi 0, %s177
      %s195 = sphi 0, %s195
      %s197 = sphi 0, %s195
      %s198 = sphi 0, %s197
      %s212 = sphi 0, %s198
      %s216 = sphi 0, %s216
      %s218 = sphi 0, %s216
      %s219 = sphi 0, %s218
      %s233 = sphi 0, %s219
      %s239 = sphi 0, %s241
      %s242 = sphi 0, %s239
      %s243 = sphi 0, %s242
      %s259 = sphi 0, %s243
    $region4: #{tpu_custom_call.1} parent=1 // loop_header_branch
      %23 = sbr.rel (%p21) target = $region8
    $region5: #{tpu_custom_call.1} parent=1 // loop_body
      %s25 = ssub.s32 %s20, 1
      %s26 = ssub.s32 %s20, 2
      %s27 = sadd.s32 %s20, 1
      %s28 = ssub.s32 %s20, %s27
      %p29 = scmp.eq.s32.totalorder %s28, 0
      %s31 = sadd.s32 %s30, 1
      %s32 = scalar_select %p29, %s30, %s31
      %p35 = pneg %p29
      %p36 = scmp.eq.s32.totalorder %s20, 1
      %p37 = por %p35, %p36
      %p38 = scmp.ne.s32.totalorder %s30, %s33
      %p39 = scmp.eq.s32.totalorder %s20, 0
      %p40 = por %p38, %p39
      %p41 = scmp.ne.s32.totalorder %s30, %s33
      %p42 = scmp.eq.s32.totalorder %s25, 1
      %p43 = por %p41, %p42
      %p44 = scmp.ne.s32.totalorder %s33, %s34
      %p45 = scmp.eq.s32.totalorder %s25, 0
      %p46 = por %p44, %p45
      %p47 = scmp.ne.s32.totalorder %s33, %s34
      %p48 = scmp.eq.s32.totalorder %s26, 1
      %p49 = por %p47, %p48
      %p51 = scmp.ne.s32.totalorder %s34, %s50
      %p52 = scmp.eq.s32.totalorder %s26, 0
      %p53 = por %p51, %p52
      %s54 = ssub.s32 %s20, %s27
      %p55 = scmp.eq.s32.totalorder %s54, 0
      %s57 = sadd.s32 %s56, 1
      %s58 = scalar_select %p55, %s56, %s57
      %p61 = pneg %p55
      %p62 = scmp.eq.s32.totalorder %s20, 1
      %p63 = por %p61, %p62
      %p64 = scmp.ne.s32.totalorder %s56, %s59
      %p65 = scmp.eq.s32.totalorder %s20, 0
      %p66 = por %p64, %p65
      %p67 = scmp.ne.s32.totalorder %s56, %s59
      %p68 = scmp.eq.s32.totalorder %s25, 1
      %p69 = por %p67, %p68
      %p70 = scmp.ne.s32.totalorder %s59, %s60
      %p71 = scmp.eq.s32.totalorder %s25, 0
      %p72 = por %p70, %p71
      %p73 = scmp.ne.s32.totalorder %s59, %s60
      %p74 = scmp.eq.s32.totalorder %s26, 1
      %p75 = por %p73, %p74
      %p77 = scmp.ne.s32.totalorder %s60, %s76
      %p78 = scmp.eq.s32.totalorder %s26, 0
      %p79 = por %p77, %p78
      %s80 = ssub.s32 %s20, %s27
      %p81 = scmp.eq.s32.totalorder %s80, 0
      %s83 = sadd.s32 %s82, 1
      %s84 = scalar_select %p81, %s82, %s83
      %p87 = pneg %p81
      %p88 = scmp.eq.s32.totalorder %s20, 1
      %p89 = por %p87, %p88
      %p90 = scmp.ne.s32.totalorder %s82, %s85
      %p91 = scmp.eq.s32.totalorder %s20, 0
      %p92 = por %p90, %p91
      %p93 = scmp.ne.s32.totalorder %s82, %s85
      %p94 = scmp.eq.s32.totalorder %s25, 1
      %p95 = por %p93, %p94
      %p96 = scmp.ne.s32.totalorder %s85, %s86
      %p97 = scmp.eq.s32.totalorder %s25, 0
      %p98 = por %p96, %p97
      %p99 = scmp.ne.s32.totalorder %s85, %s86
      %p100 = scmp.eq.s32.totalorder %s26, 1
      %p101 = por %p99, %p100
      %p103 = scmp.ne.s32.totalorder %s86, %s102
      %p104 = scmp.eq.s32.totalorder %s26, 0
      %p105 = por %p103, %p104
      %s106 = ssub.s32 %s20, %s27
      %p107 = scmp.eq.s32.totalorder %s106, 0
      %s109 = sadd.s32 %s108, 1
      %s110 = scalar_select %p107, %s108, %s109
      %p113 = pneg %p107
      %p114 = scmp.eq.s32.totalorder %s20, 1
      %p115 = por %p113, %p114
      %p116 = scmp.ne.s32.totalorder %s108, %s111
      %p117 = scmp.eq.s32.totalorder %s20, 0
      %p118 = por %p116, %p117
      %p119 = scmp.ne.s32.totalorder %s108, %s111
      %p120 = scmp.eq.s32.totalorder %s25, 1
      %p121 = por %p119, %p120
      %p122 = scmp.ne.s32.totalorder %s111, %s112
      %p123 = scmp.eq.s32.totalorder %s25, 0
      %p124 = por %p122, %p123
      %p125 = scmp.ne.s32.totalorder %s111, %s112
      %p126 = scmp.eq.s32.totalorder %s26, 1
      %p127 = por %p125, %p126
      %p129 = scmp.ne.s32.totalorder %s112, %s128
      %p130 = scmp.eq.s32.totalorder %s26, 0
      %p131 = por %p129, %p130
      %s133 = sadd.s32 %s132, 1
      %p136 = scmp.eq.s32.totalorder %s20, 1
      %p137 = scmp.ne.s32.totalorder %s132, %s134
      %p138 = scmp.eq.s32.totalorder %s20, 0
      %p139 = por %p137, %p138
      %p140 = scmp.ne.s32.totalorder %s132, %s134
      %p141 = scmp.eq.s32.totalorder %s25, 1
      %p142 = por %p140, %p141
      %p143 = scmp.ne.s32.totalorder %s134, %s135
      %p144 = scmp.eq.s32.totalorder %s25, 0
      %p145 = por %p143, %p144
      %p146 = scmp.ne.s32.totalorder %s134, %s135
      %p147 = scmp.eq.s32.totalorder %s26, 1
      %p148 = por %p146, %p147
      %p150 = scmp.ne.s32.totalorder %s135, %s149
      %p151 = scmp.eq.s32.totalorder %s26, 0
      %p152 = por %p150, %p151
      %s154 = sadd.s32 %s153, 1
      %p157 = scmp.eq.s32.totalorder %s20, 1
      %p158 = scmp.ne.s32.totalorder %s153, %s155
      %p159 = scmp.eq.s32.totalorder %s20, 0
      %p160 = por %p158, %p159
      %p161 = scmp.ne.s32.totalorder %s153, %s155
      %p162 = scmp.eq.s32.totalorder %s25, 1
      %p163 = por %p161, %p162
      %p164 = scmp.ne.s32.totalorder %s155, %s156
      %p165 = scmp.eq.s32.totalorder %s25, 0
      %p166 = por %p164, %p165
      %p167 = scmp.ne.s32.totalorder %s155, %s156
      %p168 = scmp.eq.s32.totalorder %s26, 1
      %p169 = por %p167, %p168
      %p171 = scmp.ne.s32.totalorder %s156, %s170
      %p172 = scmp.eq.s32.totalorder %s26, 0
      %p173 = por %p171, %p172
      %s175 = sadd.s32 %s174, 1
      %p178 = scmp.eq.s32.totalorder %s20, 1
      %p179 = scmp.ne.s32.totalorder %s174, %s176
      %p180 = scmp.eq.s32.totalorder %s20, 0
      %p181 = por %p179, %p180
      %p182 = scmp.ne.s32.totalorder %s174, %s176
      %p183 = scmp.eq.s32.totalorder %s25, 1
      %p184 = por %p182, %p183
      %p185 = scmp.ne.s32.totalorder %s176, %s177
      %p186 = scmp.eq.s32.totalorder %s25, 0
      %p187 = por %p185, %p186
      %p188 = scmp.ne.s32.totalorder %s176, %s177
      %p189 = scmp.eq.s32.totalorder %s26, 1
      %p190 = por %p188, %p189
      %p192 = scmp.ne.s32.totalorder %s177, %s191
      %p193 = scmp.eq.s32.totalorder %s26, 0
      %p194 = por %p192, %p193
      %s196 = sadd.s32 %s195, 1
      %p199 = scmp.eq.s32.totalorder %s20, 1
      %p200 = scmp.ne.s32.totalorder %s195, %s197
      %p201 = scmp.eq.s32.totalorder %s20, 0
      %p202 = por %p200, %p201
      %p203 = scmp.ne.s32.totalorder %s195, %s197
      %p204 = scmp.eq.s32.totalorder %s25, 1
      %p205 = por %p203, %p204
      %p206 = scmp.ne.s32.totalorder %s197, %s198
      %p207 = scmp.eq.s32.totalorder %s25, 0
      %p208 = por %p206, %p207
      %p209 = scmp.ne.s32.totalorder %s197, %s198
      %p210 = scmp.eq.s32.totalorder %s26, 1
      %p211 = por %p209, %p210
      %p213 = scmp.ne.s32.totalorder %s198, %s212
      %p214 = scmp.eq.s32.totalorder %s26, 0
      %p215 = por %p213, %p214
      %s217 = sadd.s32 %s216, 1
      %p220 = scmp.eq.s32.totalorder %s20, 1
      %p221 = scmp.ne.s32.totalorder %s216, %s218
      %p222 = scmp.eq.s32.totalorder %s20, 0
      %p223 = por %p221, %p222
      %p224 = scmp.ne.s32.totalorder %s216, %s218
      %p225 = scmp.eq.s32.totalorder %s25, 1
      %p226 = por %p224, %p225
      %p227 = scmp.ne.s32.totalorder %s218, %s219
      %p228 = scmp.eq.s32.totalorder %s25, 0
      %p229 = por %p227, %p228
      %p230 = scmp.ne.s32.totalorder %s218, %s219
      %p231 = scmp.eq.s32.totalorder %s26, 1
      %p232 = por %p230, %p231
      %p234 = scmp.ne.s32.totalorder %s219, %s233
      %p235 = scmp.eq.s32.totalorder %s26, 0
      %p236 = por %p234, %p235
      %s237 = ssub.s32 %s20, %s27
      %p238 = scmp.eq.s32.totalorder %s237, 0
      %s240 = sadd.s32 %s239, 1
      %s241 = scalar_select %p238, %s239, %s240
      %p244 = pneg %p238
      %p245 = scmp.eq.s32.totalorder %s20, 1
      %p246 = por %p244, %p245
      %p247 = scmp.ne.s32.totalorder %s239, %s242
      %p248 = scmp.eq.s32.totalorder %s20, 0
      %p249 = por %p247, %p248
      %p250 = scmp.ne.s32.totalorder %s239, %s242
      %p251 = scmp.eq.s32.totalorder %s25, 1
      %p252 = por %p250, %p251
      %p253 = scmp.ne.s32.totalorder %s242, %s243
      %p254 = scmp.eq.s32.totalorder %s25, 0
      %p255 = por %p253, %p254
      %p256 = scmp.ne.s32.totalorder %s242, %s243
      %p257 = scmp.eq.s32.totalorder %s26, 1
      %p258 = por %p256, %p257
      %p260 = scmp.ne.s32.totalorder %s243, %s259
      %p261 = scmp.eq.s32.totalorder %s26, 0
      %p262 = por %p260, %p261
      %p263 = scmp.le.s32.totalorder 1, %s20
      %p264 = scmp.lt.s32.totalorder %s20, 3
      %p265 = pnand %p263, %p264
      %p266 = pneg %p265
      // Predicated region
      $region9: #{tpu_custom_call.1} parent=5 // pred_check
        _
      $region10: #{tpu_custom_call.1} parent=5 // pred_check_branch
        %268 = sbr.rel (%p265) target = $region12
      $region11: #{tpu_custom_call.1} parent=5 // pred_region
        %s269 = ssub.s32 %s20, 1
        // Predicated region
        $region13: #{tpu_custom_call.1} parent=11 // pred_check
          %p270 = pneg %p145
        $region14: #{tpu_custom_call.1} parent=11 // pred_check_branch
          %272 = sbr.rel (%p270) target = $region16
        $region15: #{tpu_custom_call.1} parent=11 // pred_region
          %274 = vsyncadd [#allocation3], 0
          %s275 = sshll.u32 %s4, 4
          %s276 = int_to_ptr.hbm [resolvable:$true] %s275
          %s277 = sshll.u32 [#allocation2], 4
          %s278 = int_to_ptr.vmem [resolvable:$true] %s277
          %283 = dma.hbm_to_vmem [thread:$0]  %s276, 4096, %s278, [#allocation3], 256, 256, 16
        $region16: #{tpu_custom_call.1} parent=11 // pred_fallthru
          _
        // Predicated region
        $region17: #{tpu_custom_call.1} parent=11 // pred_check
          %p284 = pneg %p166
        $region18: #{tpu_custom_call.1} parent=11 // pred_check_branch
          %286 = sbr.rel (%p284) target = $region20
        $region19: #{tpu_custom_call.1} parent=11 // pred_region
          _
        $region20: #{tpu_custom_call.1} parent=11 // pred_fallthru
          _
        // Predicated region
        $region21: #{tpu_custom_call.1} parent=11 // pred_check
          %p287 = pneg %p187
        $region22: #{tpu_custom_call.1} parent=11 // pred_check_branch
          %289 = sbr.rel (%p287) target = $region24
        $region23: #{tpu_custom_call.1} parent=11 // pred_region
          %291 = vsyncadd [#allocation6], 0
          %s292 = sshll.u32 %s6, 4
          %s293 = int_to_ptr.hbm [resolvable:$true] %s292
          %s294 = sshll.u32 [#allocation5], 4
          %s295 = int_to_ptr.vmem [resolvable:$true] %s294
          %300 = dma.hbm_to_vmem [thread:$0]  %s293, 2048, %s295, [#allocation6], 128, 128, 8
        $region24: #{tpu_custom_call.1} parent=11 // pred_fallthru
          _
        // Predicated region
        $region25: #{tpu_custom_call.1} parent=11 // pred_check
          %p301 = pneg %p208
        $region26: #{tpu_custom_call.1} parent=11 // pred_check_branch
          %303 = sbr.rel (%p301) target = $region28
        $region27: #{tpu_custom_call.1} parent=11 // pred_region
          %305 = vsyncadd [#allocation6], 0
          %s306 = sshll.u32 %s7, 4
          %s307 = int_to_ptr.hbm [resolvable:$true] %s306
          %s308 = sshll.u32 [#allocation7], 4
          %s309 = int_to_ptr.vmem [resolvable:$true] %s308
          %314 = dma.hbm_to_vmem [thread:$0]  %s307, 2048, %s309, [#allocation6], 128, 128, 8
        $region28: #{tpu_custom_call.1} parent=11 // pred_fallthru
          _
        // Predicated region
        $region29: #{tpu_custom_call.1} parent=11 // pred_check
          %p315 = pneg %p229
        $region30: #{tpu_custom_call.1} parent=11 // pred_check_branch
          %317 = sbr.rel (%p315) target = $region32
        $region31: #{tpu_custom_call.1} parent=11 // pred_region
          _
        $region32: #{tpu_custom_call.1} parent=11 // pred_fallthru
          _
      $region12: #{tpu_custom_call.1} parent=5 // pred_fallthru
        _
      %p318 = scmp.lt.s32.totalorder %s20, 2
      // Predicated region
      $region33: #{tpu_custom_call.1} parent=5 // pred_check
        %p319 = pneg %p318
      $region34: #{tpu_custom_call.1} parent=5 // pred_check_branch
        %321 = sbr.rel (%p319) target = $region36
      $region35: #{tpu_custom_call.1} parent=5 // pred_region
        // Predicated region
        $region37: #{tpu_custom_call.1} parent=35 // pred_check
          %p322 = pneg %p40
        $region38: #{tpu_custom_call.1} parent=35 // pred_check_branch
          %324 = sbr.rel (%p322) target = $region40
        $region39: #{tpu_custom_call.1} parent=35 // pred_region
          %p325 = scmp.lt.s32.totalorder %s20, 1
          %s326 = scalar_select %p325, %s20, 1
          %s327 = smul.addr %s326, 8
          %s328 = scalar_lea.vmem %s0, %s327
        $region40: #{tpu_custom_call.1} parent=35 // pred_fallthru
          _
        // Predicated region
        $region41: #{tpu_custom_call.1} parent=35 // pred_check
          %p329 = pneg %p66
        $region42: #{tpu_custom_call.1} parent=35 // pred_check_branch
          %331 = sbr.rel (%p329) target = $region44
        $region43: #{tpu_custom_call.1} parent=35 // pred_region
          %p332 = scmp.lt.s32.totalorder %s20, 1
          %s333 = scalar_select %p332, %s20, 1
          %s334 = smul.addr %s333, 8
          %s335 = scalar_lea.vmem %s1, %s334
        $region44: #{tpu_custom_call.1} parent=35 // pred_fallthru
          _
        // Predicated region
        $region45: #{tpu_custom_call.1} parent=35 // pred_check
          %p336 = pneg %p92
        $region46: #{tpu_custom_call.1} parent=35 // pred_check_branch
          %338 = sbr.rel (%p336) target = $region48
        $region47: #{tpu_custom_call.1} parent=35 // pred_region
          %p339 = scmp.lt.s32.totalorder %s20, 1
          %s340 = scalar_select %p339, %s20, 1
          %s341 = smul.addr %s340, 8
          %s342 = scalar_lea.vmem %s2, %s341
        $region48: #{tpu_custom_call.1} parent=35 // pred_fallthru
          _
        // Predicated region
        $region49: #{tpu_custom_call.1} parent=35 // pred_check
          %p343 = pneg %p118
        $region50: #{tpu_custom_call.1} parent=35 // pred_check_branch
          %345 = sbr.rel (%p343) target = $region52
        $region51: #{tpu_custom_call.1} parent=35 // pred_region
          %p346 = scmp.lt.s32.totalorder %s20, 1
          %s347 = scalar_select %p346, %s20, 1
          %s348 = scalar_lea.vmem %s3, %s347
        $region52: #{tpu_custom_call.1} parent=35 // pred_fallthru
          _
      $region36: #{tpu_custom_call.1} parent=5 // pred_fallthru
        _
      %p349 = scmp.le.s32.totalorder 1, %s20
      %p350 = scmp.lt.s32.totalorder %s20, 3
      %p351 = pnand %p349, %p350
      %p352 = pneg %p351
      // Predicated region
      $region53: #{tpu_custom_call.1} parent=5 // pred_check
        _
      $region54: #{tpu_custom_call.1} parent=5 // pred_check_branch
        %354 = sbr.rel (%p351) target = $region56
      $region55: #{tpu_custom_call.1} parent=5 // pred_region
        %s355 = ssub.s32 %s20, 1
        // Predicated region
        $region57: #{tpu_custom_call.1} parent=55 // pred_check
          %p356 = pneg %p145
        $region58: #{tpu_custom_call.1} parent=55 // pred_check_branch
          %358 = sbr.rel (%p356) target = $region60
        $region59: #{tpu_custom_call.1} parent=55 // pred_region
          %360 = dma.done [#allocation3], 4096
        $region60: #{tpu_custom_call.1} parent=55 // pred_fallthru
          _
        // Predicated region
        $region61: #{tpu_custom_call.1} parent=55 // pred_check
          %p361 = pneg %p187
        $region62: #{tpu_custom_call.1} parent=55 // pred_check_branch
          %363 = sbr.rel (%p361) target = $region64
        $region63: #{tpu_custom_call.1} parent=55 // pred_region
          %365 = dma.done [#allocation6], 2048
        $region64: #{tpu_custom_call.1} parent=55 // pred_fallthru
          _
        // Predicated region
        $region65: #{tpu_custom_call.1} parent=55 // pred_check
          %p366 = pneg %p208
        $region66: #{tpu_custom_call.1} parent=55 // pred_check_branch
          %368 = sbr.rel (%p366) target = $region68
        $region67: #{tpu_custom_call.1} parent=55 // pred_region
          %370 = dma.done [#allocation6], 2048
        $region68: #{tpu_custom_call.1} parent=55 // pred_fallthru
          _
        %p371 = scmp.lt.s32.totalorder %s25, 1
        %s372 = scalar_select %p371, %s25, 1
        %s373 = smul.addr %s372, 8
        %s374 = scalar_lea.vmem %s0, %s373
        %p375 = pneg %p46
        %p376 = pneg %p43
        %p377 = scmp.lt.s32.totalorder %s25, 1
        %s378 = scalar_select %p377, %s25, 1
        %s379 = smul.addr %s378, 8
        %s380 = scalar_lea.vmem %s1, %s379
        %p381 = pneg %p72
        %p382 = pneg %p69
        %p383 = scmp.lt.s32.totalorder %s25, 1
        %s384 = scalar_select %p383, %s25, 1
        %s385 = smul.addr %s384, 8
        %s386 = scalar_lea.vmem %s2, %s385
        %p387 = pneg %p98
        %p388 = pneg %p95
        %p389 = scmp.lt.s32.totalorder %s25, 1
        %s390 = scalar_select %p389, %s25, 1
        %s391 = scalar_lea.vmem %s3, %s390
        %p392 = pneg %p124
        %p393 = pneg %p121
        %p394 = pneg %p145
        %p395 = pneg %p142
        %p396 = pneg %p166
        %p397 = pneg %p163
        %p398 = pneg %p187
        %p399 = pneg %p184
        %p400 = pneg %p208
        %p401 = pneg %p205
        %p402 = pneg %p229
        %p403 = pneg %p226
        %p404 = pneg %p255
        %p405 = pneg %p252
        %s406 = sand.u32 %s242, 1
        %s407 = scalar_lea.sflag [#allocation4], %s406
        %s408 = sand.u32 %s242, 1
        %s409 = scalar_lea.vmem [#allocation8], %s408
        %p410 = scmp.lt.s32.totalorder %s25, 1
        %s411 = scalar_select %p410, %s25, 1
        %s412 = smul.addr %s411, 8
        %s413 = scalar_lea.vmem %s0, %s412
        %p414 = scmp.lt.s32.totalorder %s25, 1
        %s415 = scalar_select %p414, %s25, 1
        %s416 = smul.addr %s415, 8
        %s417 = scalar_lea.vmem %s1, %s416
        %p418 = scmp.lt.s32.totalorder %s25, 1
        %s419 = scalar_select %p418, %s25, 1
        %s420 = smul.addr %s419, 8
        %s421 = scalar_lea.vmem %s2, %s420
        %p422 = scmp.lt.s32.totalorder %s25, 1
        %s423 = scalar_select %p422, %s25, 1
        %s424 = scalar_lea.vmem %s3, %s423
        %v425 = vld [vmem:[%s413] sm:$0xff]
        %v426 = vld [vmem:[%s417] sm:$0xff]
        %428 = vset.pattern.permute.xlu0 0
        %429 = vperm.xlu0 %428, %v426
        %v430 = vpop.permute.xlu0 %429
        %v432 = vmul.f32 %v425, %v430
        %v433 = vpack.c.bf16 %v432, %v432
        %v434 = vld [vmem:[#allocation2] sm:$0xff]
        %v435 = vld [vmem:[#allocation2 + $0x8] sm:$0xff]
        %v436 = vld [vmem:[#allocation2 + $0x10] sm:$0xff]
        %v437 = vld [vmem:[#allocation2 + $0x18] sm:$0xff]
        %v438 = vld [vmem:[#allocation2 + $0x20] sm:$0xff]
        %v439 = vld [vmem:[#allocation2 + $0x28] sm:$0xff]
        %v440 = vld [vmem:[#allocation2 + $0x30] sm:$0xff]
        %v441 = vld [vmem:[#allocation2 + $0x38] sm:$0xff]
        %v442 = vld [vmem:[#allocation2 + $0x40] sm:$0xff]
        %v443 = vld [vmem:[#allocation2 + $0x48] sm:$0xff]
        %v444 = vld [vmem:[#allocation2 + $0x50] sm:$0xff]
        %v445 = vld [vmem:[#allocation2 + $0x58] sm:$0xff]
        %v446 = vld [vmem:[#allocation2 + $0x60] sm:$0xff]
        %v447 = vld [vmem:[#allocation2 + $0x68] sm:$0xff]
        %v448 = vld [vmem:[#allocation2 + $0x70] sm:$0xff]
        %v449 = vld [vmem:[#allocation2 + $0x78] sm:$0xff]
        %v450 = vld [vmem:[#allocation2 + $0x80] sm:$0xff]
        %v451 = vld [vmem:[#allocation2 + $0x88] sm:$0xff]
        %v452 = vld [vmem:[#allocation2 + $0x90] sm:$0xff]
        %v453 = vld [vmem:[#allocation2 + $0x98] sm:$0xff]
        %v454 = vld [vmem:[#allocation2 + $0xa0] sm:$0xff]
        %v455 = vld [vmem:[#allocation2 + $0xa8] sm:$0xff]
        %v456 = vld [vmem:[#allocation2 + $0xb0] sm:$0xff]
        %v457 = vld [vmem:[#allocation2 + $0xb8] sm:$0xff]
        %v458 = vld [vmem:[#allocation2 + $0xc0] sm:$0xff]
        %v459 = vld [vmem:[#allocation2 + $0xc8] sm:$0xff]
        %v460 = vld [vmem:[#allocation2 + $0xd0] sm:$0xff]
        %v461 = vld [vmem:[#allocation2 + $0xd8] sm:$0xff]
        %v462 = vld [vmem:[#allocation2 + $0xe0] sm:$0xff]
        %v463 = vld [vmem:[#allocation2 + $0xe8] sm:$0xff]
        %v464 = vld [vmem:[#allocation2 + $0xf0] sm:$0xff]
        %v465 = vld [vmem:[#allocation2 + $0xf8] sm:$0xff]
        %v466 = vpack.c.bf16 %v436, %v434
        %v467 = vpack.c.bf16 %v437, %v435
        %v468 = vpack.c.bf16 %v440, %v438
        %v469 = vpack.c.bf16 %v441, %v439
        %v470 = vpack.c.bf16 %v444, %v442
        %v471 = vpack.c.bf16 %v445, %v443
        %v472 = vpack.c.bf16 %v448, %v446
        %v473 = vpack.c.bf16 %v449, %v447
        %v474 = vpack.c.bf16 %v452, %v450
        %v475 = vpack.c.bf16 %v453, %v451
        %v476 = vpack.c.bf16 %v456, %v454
        %v477 = vpack.c.bf16 %v457, %v455
        %v478 = vpack.c.bf16 %v460, %v458
        %v479 = vpack.c.bf16 %v461, %v459
        %v480 = vpack.c.bf16 %v464, %v462
        %v481 = vpack.c.bf16 %v465, %v463
        %v482 = vld [vmem:[%s5] sm:$0x3]
        %v484 = vperm.slane %v482, 0
        %v485 = vperm.slane %v482, 1
        %488 = vmatpush.bf16.msra.mxu0 %v480
        %489 = vmatpush.bf16.msra.mxu0 %v478
        %490 = vmatpush.bf16.msra.mxu0 %v476
        %491 = vmatpush.bf16.msra.mxu0 %v474
        %492 = vmatpush.bf16.msra.mxu0 %v472
        %493 = vmatpush.bf16.msra.mxu0 %v470
        %494 = vmatpush.bf16.msra.mxu0 %v468
        %495 = vmatpush.bf16.msra.mxu0 %v466
        %496 = vmatmul.bf16.gmra.mxu0 %v433
        %v497 = vpop.f32.mrf.mxu0
        %v498 = vadd.f32 %v484, %v497
        %v499 = vpop.f32.mrf.mxu0
        %500 = vdwg.mxu0
        %501 = vmatpush.bf16.msra.mxu0 %v481
        %502 = vmatpush.bf16.msra.mxu0 %v479
        %503 = vmatpush.bf16.msra.mxu0 %v477
        %504 = vmatpush.bf16.msra.mxu0 %v475
        %505 = vmatpush.bf16.msra.mxu0 %v473
        %506 = vmatpush.bf16.msra.mxu0 %v471
        %507 = vmatpush.bf16.msra.mxu0 %v469
        %508 = vmatpush.bf16.msra.mxu0 %v467
        %509 = vmatmul.bf16.gmra.mxu0 %v433
        %v510 = vpop.f32.mrf.mxu0
        %v511 = vadd.f32 %v485, %v510
        %v512 = vpop.f32.mrf.mxu0
        %513 = vdwg.mxu0
        %514 = vmax.xlane.f32.xlu0 %v498
        %v515 = vpop.xlane.xlu0 %514
        %v516 = vsub.f32 %v498, %v515
        %v517 = vmul.f32 %v516, 1.442695
        %v518 = vpow.pop %v517
        %519 = vadd.xlane.f32.xlu0 %v518
        %v520 = vpop.xlane.xlu0 %519
        %v521 = vrcp.pop %v520
        %v522 = vmul.f32 %v518, %v521
        %v523 = vld [vmem:[%s421] sm:$0xff]
        %525 = vset.pattern.permute.xlu0 0
        %526 = vperm.xlu0 %525, %v523
        %v527 = vpop.permute.xlu0 %526
        %v529 = vmul.f32 %v522, %v527
        %v530 = vmul.f32 %v529, %v511
        %v531 = vrot.slane %v530, 4
        %v532 = vadd.f32 %v530, %v531
        %v533 = vrot.slane %v532, 2
        %v534 = vadd.f32 %v532, %v533
        %v535 = vrot.slane %v534, 1
        %v536 = vadd.f32 %v534, %v535
        %v537 = vld [vmem:[%s424] sm:$0x1]
        %v538 = vld [vmem:[#allocation5] sm:$0xff]
        %v539 = vld [vmem:[#allocation5 + $0x8] sm:$0xff]
        %v540 = vld [vmem:[#allocation5 + $0x10] sm:$0xff]
        %v541 = vld [vmem:[#allocation5 + $0x18] sm:$0xff]
        %v542 = vld [vmem:[#allocation5 + $0x20] sm:$0xff]
        %v543 = vld [vmem:[#allocation5 + $0x28] sm:$0xff]
        %v544 = vld [vmem:[#allocation5 + $0x30] sm:$0xff]
        %v545 = vld [vmem:[#allocation5 + $0x38] sm:$0xff]
        %v546 = vld [vmem:[#allocation5 + $0x40] sm:$0xff]
        %v547 = vld [vmem:[#allocation5 + $0x48] sm:$0xff]
        %v548 = vld [vmem:[#allocation5 + $0x50] sm:$0xff]
        %v549 = vld [vmem:[#allocation5 + $0x58] sm:$0xff]
        %v550 = vld [vmem:[#allocation5 + $0x60] sm:$0xff]
        %v551 = vld [vmem:[#allocation5 + $0x68] sm:$0xff]
        %v552 = vld [vmem:[#allocation5 + $0x70] sm:$0xff]
        %v553 = vld [vmem:[#allocation5 + $0x78] sm:$0xff]
        %v554 = vld [vmem:[#allocation7] sm:$0xff]
        %v555 = vld [vmem:[#allocation7 + $0x8] sm:$0xff]
        %v556 = vld [vmem:[#allocation7 + $0x10] sm:$0xff]
        %v557 = vld [vmem:[#allocation7 + $0x18] sm:$0xff]
        %v558 = vld [vmem:[#allocation7 + $0x20] sm:$0xff]
        %v559 = vld [vmem:[#allocation7 + $0x28] sm:$0xff]
        %v560 = vld [vmem:[#allocation7 + $0x30] sm:$0xff]
        %v561 = vld [vmem:[#allocation7 + $0x38] sm:$0xff]
        %v562 = vld [vmem:[#allocation7 + $0x40] sm:$0xff]
        %v563 = vld [vmem:[#allocation7 + $0x48] sm:$0xff]
        %v564 = vld [vmem:[#allocation7 + $0x50] sm:$0xff]
        %v565 = vld [vmem:[#allocation7 + $0x58] sm:$0xff]
        %v566 = vld [vmem:[#allocation7 + $0x60] sm:$0xff]
        %v567 = vld [vmem:[#allocation7 + $0x68] sm:$0xff]
        %v568 = vld [vmem:[#allocation7 + $0x70] sm:$0xff]
        %v569 = vld [vmem:[#allocation7 + $0x78] sm:$0xff]
        %570 = vmatpush.msra.mxu0 %v569
        %571 = vmatpush.msra.mxu0 %v568
        %572 = vmatpush.msra.mxu0 %v567
        %573 = vmatpush.msra.mxu0 %v566
        %574 = vmatpush.msra.mxu0 %v565
        %575 = vmatpush.msra.mxu0 %v564
        %576 = vmatpush.msra.mxu0 %v563
        %577 = vmatpush.msra.mxu0 %v562
        %578 = vmatpush.msra.mxu0 %v561
        %579 = vmatpush.msra.mxu0 %v560
        %580 = vmatpush.msra.mxu0 %v559
        %581 = vmatpush.msra.mxu0 %v558
        %582 = vmatpush.msra.mxu0 %v557
        %583 = vmatpush.msra.mxu0 %v556
        %584 = vmatpush.msra.mxu0 %v555
        %585 = vmatpush.msra.mxu0 %v554
        %586 = vmatmul.f32.gmra.mxu0 %v537
        %v587 = vpop.f32.mrf.mxu0
        %v588 = vadd.f32 0.0, %v587
        %589 = vdwg.mxu0
        %590 = vmatpush.msra.mxu0 %v553
        %591 = vmatpush.msra.mxu0 %v552
        %592 = vmatpush.msra.mxu0 %v551
        %593 = vmatpush.msra.mxu0 %v550
        %594 = vmatpush.msra.mxu0 %v549
        %595 = vmatpush.msra.mxu0 %v548
        %596 = vmatpush.msra.mxu0 %v547
        %597 = vmatpush.msra.mxu0 %v546
        %598 = vmatpush.msra.mxu0 %v545
        %599 = vmatpush.msra.mxu0 %v544
        %600 = vmatpush.msra.mxu0 %v543
        %601 = vmatpush.msra.mxu0 %v542
        %602 = vmatpush.msra.mxu0 %v541
        %603 = vmatpush.msra.mxu0 %v540
        %604 = vmatpush.msra.mxu0 %v539
        %605 = vmatpush.msra.mxu0 %v538
        %606 = vmatmul.f32.gmra.mxu0 %v536
        %v607 = vpop.f32.mrf.mxu0
        %v608 = vadd.f32 %v588, %v607
        %609 = vdwg.mxu0
        %v610 = vld [vmem:[%s8] sm:$0x1]
        %v611 = vadd.f32 %v608, %v610
        %v612 = vadd.f32 %v537, %v611
        %613 = vst [vmem:[%s409] sm:$0x1] %v612
        %s614 = sand.u32 %s242, 1
        %s615 = scalar_lea.sflag [#allocation4], %s614
        %s616 = sand.u32 %s242, 1
        %s617 = scalar_lea.vmem [#allocation8], %s616
        // Predicated region
        $region69: #{tpu_custom_call.1} parent=55 // pred_check
          %p618 = pneg %p252
        $region70: #{tpu_custom_call.1} parent=55 // pred_check_branch
          %620 = sbr.rel (%p618) target = $region72
        $region71: #{tpu_custom_call.1} parent=55 // pred_region
          %622 = vsyncadd %s615, 0
          %s623 = scalar_lea.hbm %s9, %s25
          %s625 = sshll.u32 %s617, 4
          %s626 = int_to_ptr.vmem [resolvable:$true] %s625
          %s627 = sshll.u32 %s623, 4
          %s628 = int_to_ptr.hbm [resolvable:$true] %s627
          %630 = dma.vmem_to_hbm [thread:$0]  %s626, 16, %s628, %s615
        $region72: #{tpu_custom_call.1} parent=55 // pred_fallthru
          _
      $region56: #{tpu_custom_call.1} parent=5 // pred_fallthru
        _
      %p631 = scmp.le.s32.totalorder 2, %s20
      // Predicated region
      $region73: #{tpu_custom_call.1} parent=5 // pred_check
        %p632 = pneg %p631
      $region74: #{tpu_custom_call.1} parent=5 // pred_check_branch
        %634 = sbr.rel (%p632) target = $region76
      $region75: #{tpu_custom_call.1} parent=5 // pred_region
        %s635 = ssub.s32 %s20, 2
        // Predicated region
        $region77: #{tpu_custom_call.1} parent=75 // pred_check
          %p636 = pneg %p258
        $region78: #{tpu_custom_call.1} parent=75 // pred_check_branch
          %638 = sbr.rel (%p636) target = $region80
        $region79: #{tpu_custom_call.1} parent=75 // pred_region
          %s639 = sand.u32 %s243, 1
          %s640 = scalar_lea.sflag [#allocation4], %s639
          %s641 = sand.u32 %s243, 1
          %s642 = scalar_lea.vmem [#allocation8], %s641
          %644 = dma.done %s640, 16
        $region80: #{tpu_custom_call.1} parent=75 // pred_fallthru
          _
      $region76: #{tpu_custom_call.1} parent=5 // pred_fallthru
        _
    $region6: #{tpu_custom_call.1} parent=1 // loop_footer
      %s24 = sadd.s32 1, %s20
    $region7: #{tpu_custom_call.1} parent=1 // loop_footer_branch
      %19 = sbr.rel target = $region3
    $region8: #{tpu_custom_call.1} parent=1 // loop_exit
      _
    %645 = vsyncpa [#allocation3], 1
    %s646 = scalar_lea.sflag [#allocation3], 1
    %647 = vsyncpa %s646, 1
    %648 = vsyncpa [#allocation6], 1
    %649 = vsyncpa [#allocation4], 1
    %s650 = scalar_lea.sflag [#allocation4], 1
    %651 = vsyncpa %s650, 1

</llo_original>
